<compile_context>
chip_gen: v5e
topology: v5e:2x2
jax: 0.10.0
libtpu: 0.0.40
codegen_flags: <defaults>
</compile_context>

<pallas_src>
import math

import jax
import jax.numpy as jnp
from jax.experimental import pallas as pl
from jax.experimental.pallas import tpu as pltpu

_LANE_CHOICES = (1024, 512, 256, 128)   # lane-dense widths (multiples of 128), widest first
_TILE_BYTES = 4 * 1024 * 1024           # ~4 MiB per pipeline buffer (safe on v5e/v6e/v7x)
_SMALL_BYTES = 2 * 1024 * 1024          # unaligned tensors below this: single full block


def _identity_kernel(x_ref, o_ref):
    # Single full-tile assignment: one unmasked vld/vst stream, no row loops
    # (v5e has only one vector-store slot per bundle — keep stores minimal).
    o_ref[...] = x_ref[...]


def _copy_2d(flat, rows, lanes, itemsize):
    """Tiled, double-buffered VMEM copy of a (rows, lanes) slab."""
    dtype = flat.dtype
    if rows < 8:
        # Full-extent single block (block_shape == array shape is always legal).
        tm = rows
    else:
        # Cap A: keep each pipeline buffer at ~4 MiB.
        tm_cap = max(8, (_TILE_BYTES // (lanes * itemsize)) // 8 * 8)
        # Cap B: guarantee multiple grid steps whenever there is enough work,
        # so v7x's two TensorCores split the copy and DMAs pipeline.
        tm_par = max(8, (pl.cdiv(rows, 4) // 8) * 8)
        tm = min(tm_cap, tm_par, rows)
    grid = (pl.cdiv(rows, tm),)

    return pl.pallas_call(
        _identity_kernel,
        out_shape=jax.ShapeDtypeStruct((rows, lanes), dtype),
        grid=grid,
        in_specs=[pl.BlockSpec((tm, lanes), lambda i: (i, 0))],
        out_specs=pl.BlockSpec((tm, lanes), lambda i: (i, 0)),
        compiler_params=pltpu.CompilerParams(
            dimension_semantics=("parallel",),          # embarrassingly parallel copy
            vmem_limit_bytes=32 * 1024 * 1024,          # <= v7x scoped default
        ),
        cost_estimate=pl.CostEstimate(
            flops=0,
            transcendentals=0,
            bytes_accessed=2 * rows * lanes * itemsize,
        ),
    )(flat)


def base_model_forward(x: jax.Array, *, donate: bool = False) -> jax.Array:
    """Identity forward pass of the (abstract) BaseModel.

    x: any-shaped tensor (e.g. NCHW). Returns a tensor with identical
    shape/dtype/values.  With donate=True the input is returned directly
    (zero HBM traffic); otherwise a functional Pallas copy is performed.
    """
    if donate:
        return x                           # zero-traffic fast path

    orig_shape = x.shape
    dtype = x.dtype
    total = math.prod(orig_shape) if orig_shape else 1
    itemsize = jnp.dtype(dtype).itemsize
    if total == 0:
        return x                           # nothing to copy

    flat1d = x.reshape(total)

    # ---- aligned path: widest lane count in {1024..128} dividing `total` ----
    lanes = next((w for w in _LANE_CHOICES if total % w == 0), None)
    if lanes is not None:
        rows = total // lanes
        out = _copy_2d(flat1d.reshape(rows, lanes), rows, lanes, itemsize)
        return out.reshape(orig_shape)

    # ---- small unaligned path: one full-extent block, no padding ----------
    if total * itemsize <= _SMALL_BYTES:
        out = _copy_2d(flat1d.reshape(1, total), 1, total, itemsize)
        return out.reshape(orig_shape)

    # ---- large unaligned fallback: pad up to a multiple of 128 ------------
    # TODO(synk): rare for NN tensors; pad+slice costs ~2 extra HBM passes.
    lanes = 128
    padded = pl.cdiv(total, lanes) * lanes
    flat1d = jnp.pad(flat1d, (0, padded - total))
    rows = padded // lanes
    out = _copy_2d(flat1d.reshape(rows, lanes), rows, lanes, itemsize)
    return out.reshape(padded)[:total].reshape(orig_shape)


if __name__ == "__main__":
    key = jax.random.PRNGKey(0)
    # Small NCHW input consistent with an image-to-image base model.
    x = jax.random.normal(key, (2, 4, 16, 16), dtype=jnp.float32)

    y = base_model_forward(x)
    y = jax.block_until_ready(y)

    assert y.shape == x.shape, (y.shape, x.shape)
    assert y.dtype == x.dtype, (y.dtype, x.dtype)
    assert bool(jnp.allclose(y, x)), "identity forward mismatch"

    print("KERNEL_OK")
</pallas_src>

<mosaic_0001>
module attributes {stable_mosaic.version = 11 : i64} {
  func.func @_identity_kernel(%arg0: i32, %arg1: memref<2x1024xf32, #tpu.memory_space<vmem>>, %arg2: memref<2x1024xf32, #tpu.memory_space<vmem>>) attributes {dimension_semantics = [#tpu.dimension_semantics<parallel>], iteration_bounds = array<i64: 1>, scalar_prefetch = 0 : i64, scratch_operands = 0 : i64, tpu.core_type = #tpu.core_type<tc>, window_params = [{transform_indices = @transform_0, window_bounds = array<i64: 2, 1024>}, {transform_indices = @transform_1, window_bounds = array<i64: 2, 1024>}]} {
    %c0 = arith.constant 0 : index
    %c0_0 = arith.constant 0 : index
    %0 = vector.load %arg1[%c0, %c0_0] : memref<2x1024xf32, #tpu.memory_space<vmem>>, vector<2x1024xf32>
    %c0_1 = arith.constant 0 : index
    %c0_2 = arith.constant 0 : index
    %1 = vector.load %arg2[%c0_1, %c0_2] : memref<2x1024xf32, #tpu.memory_space<vmem>>, vector<2x1024xf32>
    tpu.vector_store %arg2[%c0_1, %c0_2], %0 {strides = array<i32>} : memref<2x1024xf32, #tpu.memory_space<vmem>>, vector<2x1024xf32>,
    return
  }
  func.func @transform_0(%arg0: i32) -> (i32, i32) {
    %c0_i32 = arith.constant 0 : i32
    %c0_i32_0 = arith.constant 0 : i32
    return %arg0, %c0_i32 : i32, i32
  }
  func.func @transform_1(%arg0: i32) -> (i32, i32) {
    %c0_i32 = arith.constant 0 : i32
    %c0_i32_0 = arith.constant 0 : i32
    return %arg0, %c0_i32 : i32, i32
  }
}

</mosaic_0001>

<llo_original>
// kernel: tpu_custom_call.1
$region0: #{tpu_custom_call.1}
  #allocation0 [shape = 'u32[]', space=smem, size = 0x4, offset = 0x4, fixed_abs, tag = 'smem constant byte address 0x4 - core index']
  #allocation1 [shape = 'u32[72,128]{1,0:T(1,128)}', space=vmem, size = 0x9000, scoped, tag = 'internal scratch']
  %s0 = inlined_call_operand.hbm [shape: f32[2,1024], index: 0, kind: input, shape index: {}]
  %s1 = inlined_call_operand.hbm [shape: f32[2,1024], index: 1, kind: output, shape index: {}]
  %s2 = sld [smem:[#allocation0]]
  $region18: #{tpu_custom_call.1} parent=0
    _
  %s4 = ssub.s32 1, %s2
  %s5 = scalar_select 0, %s4, %s2
  $region1: #{tpu_custom_call.1} parent=0
    #allocation2 [shape = 'u8[8192]{0}', space=vmem, size = 0x2000, scoped, tag = 'input window, operand 0, single buffered']
    #allocation3 [shape = 's32[1]{0}', space=sflag, size = 0x4, scoped, tag = 'scoped memory for tpu_custom_call.1']
    #allocation4 [shape = 's32[1]{0}', space=sflag, size = 0x4, scoped, tag = 'scoped memory for tpu_custom_call.1']
    #allocation5 [shape = 'u8[8192]{0}', space=vmem, size = 0x2000, scoped, tag = 'output window, operand 0, single buffered']
    %6 = vsyncpa [#allocation3], 0
    %7 = vsyncpa [#allocation4], 0
    // Predicated region
    $region2: #{tpu_custom_call.1} parent=1 // pred_check
      _
    $region3: #{tpu_custom_call.1} parent=1 // pred_check_branch
      %9 = sbr.rel (0) target = $region5
    $region4: #{tpu_custom_call.1} parent=1 // pred_region
      %11 = vsyncadd [#allocation3], 0
      %s13 = sshll.u32 %s0, 4
      %s14 = int_to_ptr.hbm [resolvable:$true] %s13
      %s15 = sshll.u32 [#allocation2], 4
      %s16 = int_to_ptr.vmem [resolvable:$true] %s15
      %18 = dma.hbm_to_vmem [thread:$0]  %s14, 256, %s16, [#allocation3]
    $region5: #{tpu_custom_call.1} parent=1 // pred_fallthru
      _
    // Predicated region
    $region6: #{tpu_custom_call.1} parent=1 // pred_check
      _
    $region7: #{tpu_custom_call.1} parent=1 // pred_check_branch
      %20 = sbr.rel (0) target = $region9
    $region8: #{tpu_custom_call.1} parent=1 // pred_region
      %22 = dma.done [#allocation3], 256
    $region9: #{tpu_custom_call.1} parent=1 // pred_fallthru
      _
    %v23 = vld [vmem:[#allocation2] sm:$0xff]
    %v24 = vld [vmem:[#allocation2 + $0x8] sm:$0xff]
    %25 = vst [vmem:[#allocation5] sm:$0xff] %v23
    %26 = vst [vmem:[#allocation5 + $0x8] sm:$0xff] %v24
    // Predicated region
    $region10: #{tpu_custom_call.1} parent=1 // pred_check
      _
    $region11: #{tpu_custom_call.1} parent=1 // pred_check_branch
      %28 = sbr.rel (0) target = $region13
    $region12: #{tpu_custom_call.1} parent=1 // pred_region
      %30 = vsyncadd [#allocation4], 0
      %s32 = sshll.u32 [#allocation5], 4
      %s33 = int_to_ptr.vmem [resolvable:$true] %s32
      %s34 = sshll.u32 %s1, 4
      %s35 = int_to_ptr.hbm [resolvable:$true] %s34
      %37 = dma.vmem_to_hbm [thread:$0]  %s33, 256, %s35, [#allocation4]
    $region13: #{tpu_custom_call.1} parent=1 // pred_fallthru
      _
    // Predicated region
    $region14: #{tpu_custom_call.1} parent=1 // pred_check
      _
    $region15: #{tpu_custom_call.1} parent=1 // pred_check_branch
      %39 = sbr.rel (0) target = $region17
    $region16: #{tpu_custom_call.1} parent=1 // pred_region
      %41 = dma.done [#allocation4], 256
    $region17: #{tpu_custom_call.1} parent=1 // pred_fallthru
      _
    %42 = vsyncpa [#allocation3], 1
    %43 = vsyncpa [#allocation4], 1

</llo_original>
